<compile_context>
chip_gen: v5e
topology: v5e:2x2
jax: 0.10.0
libtpu: 0.0.40
codegen_flags: <defaults>
</compile_context>

<pallas_src>
import functools

import jax
import jax.numpy as jnp
from jax.experimental import pallas as pl
from jax.experimental.pallas import tpu as pltpu


def _act_quant_pact_kernel(scale_ref, x_ref, o_ref, *, act_bit):
    # scale_ref: (1,) f32 in SMEM (the signed scale parameter)
    # x_ref / o_ref: (block_rows, lane) tiles in VMEM
    s = scale_ref[0]                                # signed parameter
    alpha = jnp.abs(s)                              # PACT clipping level
    n = jnp.float32(2.0 ** act_bit)
    inv_n = jnp.float32(1.0 / (2.0 ** act_bit))     # exact (power of two)

    # One scalar divide per tile (scalar path) instead of a vector divide per
    # element; with s == 1.0 this is bit-identical to (out / s) * n.
    q_scale = n / s

    x = x_ref[...].astype(jnp.float32)
    # clamp(x, 0, alpha) == 0.5 * (|x| - |x - alpha| + alpha) for alpha >= 0
    # (2 VPU ops instead of 5, no extra f32 rounding noise).
    clipped = jnp.clip(x, 0.0, alpha)
    q = jnp.clip(jnp.round(clipped * q_scale), -n, n - 1.0) * inv_n
    o_ref[...] = q.astype(o_ref.dtype)


def _lane_dense_2d(total, orig_shape):
    """Pick a (rows, lane) factorization with lane a large multiple of 128."""
    for lane in (4096, 2048, 1024, 512, 256, 128):
        if total % lane == 0:
            return total // lane, lane
    # Fallback: keep the natural trailing dim (full-extent last-dim blocks are
    # always legal); stores may be masked if it is not a multiple of 128.
    lane = orig_shape[-1]
    return total // lane, lane


def act_quant_pact(x, scale_coef, act_bit=4, *, donate_input=False):
    """x: NCHW float array; scale_coef: shape-(1,) float32 parameter."""
    assert act_bit != 32, "act_bit==32 path is buggy in the reference module"
    orig_shape = x.shape
    total = x.size
    itemsize = x.dtype.itemsize

    rows, lane = _lane_dense_2d(total, orig_shape)
    x2d = x.reshape(rows, lane)

    # ~4 MiB per tile => ~16 MiB of double-buffered in+out VMEM; we raise the
    # scoped-VMEM limit to 32 MiB so this fits on every generation (v5e default
    # is only 16 MiB) while leaving headroom under the v7x 64 MiB physical VMEM.
    tile_bytes = 4 * 1024 * 1024
    block_rows = max(1, tile_bytes // (lane * itemsize))
    if block_rows >= rows:
        block_rows = rows                           # single full-extent row block
    else:
        block_rows = max(8, (block_rows // 8) * 8)  # sublane-aligned
        block_rows = min(block_rows, rows)

    grid = (pl.cdiv(rows, block_rows),)
    kernel = functools.partial(_act_quant_pact_kernel, act_bit=act_bit)

    out2d = pl.pallas_call(
        kernel,
        out_shape=jax.ShapeDtypeStruct((rows, lane), x.dtype),
        grid=grid,
        in_specs=[
            # scalar parameter: whole (1,) array in SMEM every step
            pl.BlockSpec(memory_space=pltpu.MemorySpace.SMEM),
            pl.BlockSpec((block_rows, lane), lambda i: (i, 0)),
        ],
        out_specs=pl.BlockSpec((block_rows, lane), lambda i: (i, 0)),
        compiler_params=pltpu.CompilerParams(
            dimension_semantics=("parallel",),      # lets v7x shard across 2 TCs
            vmem_limit_bytes=32 * 1024 * 1024,
        ),
        cost_estimate=pl.CostEstimate(
            flops=6 * total,
            transcendentals=0,
            bytes_accessed=2 * total * itemsize + 4,
        ),
        # Optional HBM-footprint saver when the caller no longer needs x.
        input_output_aliases=({1: 0} if donate_input else {}),
    )(scale_coef, x2d)
    return out2d.reshape(orig_shape)


def _reference(x, scale_coef, act_bit=4):
    # Verbatim PyTorch math (PACT identity + uniform_quantize), in JAX.
    s = scale_coef[0]
    a = jnp.abs(s)
    out = 0.5 * (jnp.abs(x) - jnp.abs(x - a) + a)
    n = 2.0 ** act_bit
    return jnp.clip(jnp.round(out / s * n), -n, n - 1.0) / n


if __name__ == "__main__":
    key = jax.random.PRNGKey(0)
    # Matches nn.Parameter(torch.ones(1) * scale_coef) with scale_coef=1.0
    scale_coef = jnp.ones((1,), dtype=jnp.float32) * 1.0

    # Small NCHW input
    x = jax.random.normal(key, (2, 4, 16, 16), dtype=jnp.float32)

    out = act_quant_pact(x, scale_coef, act_bit=4)
    out = jax.block_until_ready(out)

    assert out.shape == x.shape and out.dtype == x.dtype
    ref = _reference(x, scale_coef, act_bit=4)
    assert jnp.allclose(out, ref, atol=1e-6), "mismatch vs reference"

    # Sanity check: the clamp form used in the kernel equals the verbatim
    # PyTorch PACT identity (pre-quantization) to within f32 rounding noise.
    a = jnp.abs(scale_coef[0])
    pact_identity = 0.5 * (jnp.abs(x) - jnp.abs(x - a) + a)
    assert jnp.allclose(pact_identity, jnp.clip(x, 0.0, a), atol=1e-5)

    print("KERNEL_OK")
</pallas_src>

<mosaic_0001>
module attributes {stable_mosaic.version = 11 : i64} {
  func.func @_act_quant_pact_kernel(%arg0: i32, %arg1: memref<1xf32, #tpu.memory_space<smem>>, %arg2: memref<1x2048xf32, #tpu.memory_space<vmem>>, %arg3: memref<1x2048xf32, #tpu.memory_space<vmem>>) attributes {dimension_semantics = [#tpu.dimension_semantics<parallel>], iteration_bounds = array<i64: 1>, scalar_prefetch = 0 : i64, scratch_operands = 0 : i64, tpu.core_type = #tpu.core_type<tc>, window_params = [{transform_indices = @transform_0, window_bounds = array<i64: 1>}, {transform_indices = @transform_1, window_bounds = array<i64: 1, 2048>}, {transform_indices = @transform_2, window_bounds = array<i64: 1, 2048>}]} {
    %c0 = arith.constant 0 : index
    %0 = memref.load %arg1[%c0] : memref<1xf32, #tpu.memory_space<smem>>
    %1 = math.absf %0 : f32
    %cst = arith.constant 1.600000e+01 : f32
    %2 = arith.divf %cst, %0 : f32
    %c0_0 = arith.constant 0 : index
    %c0_1 = arith.constant 0 : index
    %3 = vector.load %arg2[%c0_0, %c0_1] : memref<1x2048xf32, #tpu.memory_space<vmem>>, vector<1x2048xf32>
    %cst_2 = arith.constant 0.000000e+00 : f32
    %4 = vector.broadcast %cst_2 : f32 to vector<1x2048xf32>
    %5 = arith.maximumf %4, %3 : vector<1x2048xf32>
    %6 = vector.broadcast %1 : f32 to vector<1x2048xf32>
    %7 = arith.minimumf %6, %5 : vector<1x2048xf32>
    %8 = vector.broadcast %2 : f32 to vector<1x2048xf32>
    %9 = arith.mulf %7, %8 : vector<1x2048xf32>
    %10 = math.roundeven %9 : vector<1x2048xf32>
    %cst_3 = arith.constant 0.000000e+00 : f32
    %cst_4 = arith.constant 1.600000e+01 : f32
    %11 = arith.subf %cst_3, %cst_4 : f32
    %cst_5 = arith.constant 1.600000e+01 : f32
    %cst_6 = arith.constant 1.000000e+00 : f32
    %12 = arith.subf %cst_5, %cst_6 : f32
    %13 = vector.broadcast %11 : f32 to vector<1x2048xf32>
    %14 = arith.maximumf %13, %10 : vector<1x2048xf32>
    %15 = vector.broadcast %12 : f32 to vector<1x2048xf32>
    %16 = arith.minimumf %15, %14 : vector<1x2048xf32>
    %cst_7 = arith.constant 6.250000e-02 : f32
    %17 = vector.broadcast %cst_7 : f32 to vector<1x2048xf32>
    %18 = arith.mulf %16, %17 : vector<1x2048xf32>
    %c0_8 = arith.constant 0 : index
    %c0_9 = arith.constant 0 : index
    %19 = vector.load %arg3[%c0_8, %c0_9] : memref<1x2048xf32, #tpu.memory_space<vmem>>, vector<1x2048xf32>
    tpu.vector_store %arg3[%c0_8, %c0_9], %18 {strides = array<i32>} : memref<1x2048xf32, #tpu.memory_space<vmem>>, vector<1x2048xf32>,
    return
  }
  func.func @transform_0(%arg0: i32) -> i32 {
    %c0_i32 = arith.constant 0 : i32
    %c0_i32_0 = arith.constant 0 : i32
    return %c0_i32 : i32
  }
  func.func @transform_1(%arg0: i32) -> (i32, i32) {
    %c0_i32 = arith.constant 0 : i32
    %c0_i32_0 = arith.constant 0 : i32
    return %arg0, %c0_i32 : i32, i32
  }
  func.func @transform_2(%arg0: i32) -> (i32, i32) {
    %c0_i32 = arith.constant 0 : i32
    %c0_i32_0 = arith.constant 0 : i32
    return %arg0, %c0_i32 : i32, i32
  }
}

</mosaic_0001>

<llo_original>
// kernel: tpu_custom_call.1
$region0: #{tpu_custom_call.1}
  #allocation0 [shape = 'u32[]', space=smem, size = 0x4, offset = 0x4, fixed_abs, tag = 'smem constant byte address 0x4 - core index']
  #allocation1 [shape = 'u32[72,128]{1,0:T(1,128)}', space=vmem, size = 0x9000, scoped, tag = 'internal scratch']
  #allocation2 [shape = 'f32[1]{0:T(128)S(6)}', space=smem, size = 0x200, scoped, tag = 'scoped memory for tpu_custom_call.1']
  %s0 = inlined_call_operand.<no memory space> [shape: f32[1], index: 0, kind: input, shape index: {}]
  %s1 = inlined_call_operand.hbm [shape: f32[1,2048], index: 1, kind: input, shape index: {}]
  %s2 = inlined_call_operand.hbm [shape: f32[1,2048], index: 2, kind: output, shape index: {}]
  %s3 = sld [smem:[#allocation0]]
  $region22: #{tpu_custom_call.1} parent=0
    _
  %s5 = ssub.s32 1, %s3
  %s6 = scalar_select 0, %s5, %s3
  %7 = sst [smem:[#allocation2]] %s0
  $region1: #{tpu_custom_call.1} parent=0
    #allocation3 [shape = 'u8[8192]{0}', space=vmem, size = 0x2000, scoped, tag = 'input window, operand 1, single buffered']
    #allocation4 [shape = 's32[1]{0}', space=sflag, size = 0x4, scoped, tag = 'scoped memory for tpu_custom_call.1']
    #allocation5 [shape = 's32[1]{0}', space=sflag, size = 0x4, scoped, tag = 'scoped memory for tpu_custom_call.1']
    #allocation6 [shape = 'u8[8192]{0}', space=vmem, size = 0x2000, scoped, tag = 'output window, operand 0, single buffered']
    %8 = vsyncpa [#allocation4], 0
    %9 = vsyncpa [#allocation5], 0
    // Predicated region
    $region2: #{tpu_custom_call.1} parent=1 // pred_check
      _
    $region3: #{tpu_custom_call.1} parent=1 // pred_check_branch
      %11 = sbr.rel (0) target = $region5
    $region4: #{tpu_custom_call.1} parent=1 // pred_region
      _
    $region5: #{tpu_custom_call.1} parent=1 // pred_fallthru
      _
    // Predicated region
    $region6: #{tpu_custom_call.1} parent=1 // pred_check
      _
    $region7: #{tpu_custom_call.1} parent=1 // pred_check_branch
      %13 = sbr.rel (0) target = $region9
    $region8: #{tpu_custom_call.1} parent=1 // pred_region
      %15 = vsyncadd [#allocation4], 0
      %s17 = sshll.u32 %s1, 4
      %s18 = int_to_ptr.hbm [resolvable:$true] %s17
      %s19 = sshll.u32 [#allocation3], 4
      %s20 = int_to_ptr.vmem [resolvable:$true] %s19
      %22 = dma.hbm_to_vmem [thread:$0]  %s18, 256, %s20, [#allocation4]
    $region9: #{tpu_custom_call.1} parent=1 // pred_fallthru
      _
    // Predicated region
    $region10: #{tpu_custom_call.1} parent=1 // pred_check
      _
    $region11: #{tpu_custom_call.1} parent=1 // pred_check_branch
      %24 = sbr.rel (0) target = $region13
    $region12: #{tpu_custom_call.1} parent=1 // pred_region
      %26 = dma.done [#allocation4], 256
    $region13: #{tpu_custom_call.1} parent=1 // pred_fallthru
      _
    %s27 = sld [smem:[#allocation2]]
    %s28 = sand.u32 2147483647, %s27
    %v29 = vstv %s27
    %v30 = vrcp.pop %v29
    %v31 = vmul.f32 %v29, %v30
    %v32 = vsub.f32 1.0, %v31
    %v33 = vmul.f32 %v30, %v32
    %v34 = vadd.f32 %v30, %v33
    %vm35 = vweird.f32 %v29
    %vm36 = vweird.f32 %v30
    %vm37 = vmor %vm35, %vm36
    %v38 = vsel %vm37, %v30, %v34
    %v39 = vand.u32 2147483647, %v29
    %vm40 = vcmp.eq.f32.partialorder %v39, 8.507059e+37
    %v41 = vand.u32 %v29, 2147483648
    %v42 = vor.u32 1.1754944e-38, %v41
    %v43 = vsel %vm40, %v42, %v38
    %s44 = vtos %v43
    %s45 = smul.f32 16.0, %s44
    %v46 = vld [vmem:[#allocation3] sm:$0xff]
    %v47 = vld [vmem:[#allocation3 + $0x8] sm:$0xff]
    %v48 = vmax.f32 %v46, 0.0
    %v49 = vmax.f32 %v47, 0.0
    %v50 = vstv %s28
    %v51 = vmin.f32 %v50, %v48
    %v52 = vmin.f32 %v50, %v49
    %v53 = vstv %s45
    %v54 = vmul.f32 %v51, %v53
    %v55 = vmul.f32 %v52, %v53
    %v56 = vround.ne.pseudo %v54
    %v57 = vround.ne.pseudo %v55
    %v58 = vmax.f32 %v56, -16.0
    %v59 = vmax.f32 %v57, -16.0
    %v60 = vmin.f32 %v58, 15.0
    %v61 = vmin.f32 %v59, 15.0
    %v62 = vmul.f32 %v60, 0.0625
    %v63 = vmul.f32 %v61, 0.0625
    %64 = vst [vmem:[#allocation6] sm:$0xff] %v62
    %65 = vst [vmem:[#allocation6 + $0x8] sm:$0xff] %v63
    // Predicated region
    $region14: #{tpu_custom_call.1} parent=1 // pred_check
      _
    $region15: #{tpu_custom_call.1} parent=1 // pred_check_branch
      %67 = sbr.rel (0) target = $region17
    $region16: #{tpu_custom_call.1} parent=1 // pred_region
      %69 = vsyncadd [#allocation5], 0
      %s71 = sshll.u32 [#allocation6], 4
      %s72 = int_to_ptr.vmem [resolvable:$true] %s71
      %s73 = sshll.u32 %s2, 4
      %s74 = int_to_ptr.hbm [resolvable:$true] %s73
      %76 = dma.vmem_to_hbm [thread:$0]  %s72, 256, %s74, [#allocation5]
    $region17: #{tpu_custom_call.1} parent=1 // pred_fallthru
      _
    // Predicated region
    $region18: #{tpu_custom_call.1} parent=1 // pred_check
      _
    $region19: #{tpu_custom_call.1} parent=1 // pred_check_branch
      %78 = sbr.rel (0) target = $region21
    $region20: #{tpu_custom_call.1} parent=1 // pred_region
      %80 = dma.done [#allocation5], 256
    $region21: #{tpu_custom_call.1} parent=1 // pred_fallthru
      _
    %81 = vsyncpa [#allocation4], 1
    %82 = vsyncpa [#allocation5], 1

</llo_original>
